<compile_context>
chip_gen: v7x
topology: tpu7x:2x2x1
jax: 0.10.0
libtpu: 0.0.40
codegen_flags: <defaults>
</compile_context>

<pallas_src>
from functools import partial

import jax
import jax.numpy as jnp
from jax import lax
from jax.experimental import pallas as pl
from jax.experimental.pallas import tpu as pltpu


def _round_up(a, b):
    return (a + b - 1) // b * b


# ----------------------------------------------------------------------------
# Fused VQ kernel (one grid step = one tile of `tm` input rows)
# ----------------------------------------------------------------------------
def _vq_kernel(x_ref, emb_ref, embt_ref, esq_ref,
               q_ref, enc_ref, stats_ref, *, m_valid):
    tm, d = x_ref.shape
    k = emb_ref.shape[0]

    x = x_ref[...]                                      # (tm, D) f32
    e_sq = esq_ref[...]                                 # (1, K)  f32 (precomputed)

    # Distance matmul in bf16 (full MXU rate), f32 accumulation.
    xe = jnp.dot(x.astype(jnp.bfloat16), embt_ref[...],
                 preferred_element_type=jnp.float32)    # (tm, K)
    # argmin is invariant to the per-row |x|^2 constant, so it is dropped.
    dist = e_sq - 2.0 * xe                              # (tm, K)

    # argmin over the codebook axis, first-index tie-break (matches torch.argmin).
    iota = lax.broadcasted_iota(jnp.int32, (tm, k), 1)
    d_min = jnp.min(dist, axis=1, keepdims=True)
    idx = jnp.min(jnp.where(dist == d_min, iota, k), axis=1, keepdims=True)

    # One-hot encodings (replaces torch scatter_); stored as bf16 (0/1 exact).
    enc = (iota == idx).astype(jnp.float32)             # (tm, K)
    enc_ref[...] = enc.astype(enc_ref.dtype)

    # quantized = encodings @ embedding: exact codebook gather, kept in f32.
    quantized = jnp.dot(enc, emb_ref[...], preferred_element_type=jnp.float32)
    q_ref[...] = quantized                              # (tm, D)

    # Row validity mask (padded rows contribute nothing to the statistics).
    rows = pl.program_id(0) * tm + lax.broadcasted_iota(jnp.int32, (tm, 1), 0)
    valid = (rows < m_valid).astype(jnp.float32)        # (tm, 1)

    # Partial squared-error sum for the MSE loss.
    diff = quantized - x
    d2 = diff * diff * valid                            # (tm, D)
    sse = jnp.sum(jnp.sum(d2, axis=0, keepdims=True), axis=1, keepdims=True)  # (1,1)

    # Partial codebook histogram for the perplexity.
    hist = jnp.sum(enc * valid, axis=0, keepdims=True)  # (1, K)

    stats = jnp.concatenate([hist, jnp.broadcast_to(sse, (1, k))], axis=0)
    stats_ref[...] = stats.reshape(1, 2, k)


# ----------------------------------------------------------------------------
# Wrapper: layout prep, gridded pallas_call, tiny final reduction
# ----------------------------------------------------------------------------
def vector_quantizer_forward(inputs, embedding, commitment_cost,
                             *, block_rows=1024, encodings_dtype=jnp.bfloat16):
    """Forward of VectorQuantizer: returns (loss, quantized, perplexity, encodings)."""
    input_shape = inputs.shape
    k, d = embedding.shape
    flat = inputs.reshape(-1, d).astype(jnp.float32)
    m = flat.shape[0]

    # Tile size: multiple of 16 (bf16 sublane packing), big enough to pipeline.
    tm = min(block_rows, _round_up(m, 16))
    m_pad = _round_up(m, tm)
    num_tiles = m_pad // tm
    flat_p = jnp.pad(flat, ((0, m_pad - m), (0, 0))) if m_pad != m else flat

    # One-time codebook prep (weight prep, not part of the hot loop).
    emb = embedding.astype(jnp.float32)                       # (K, D) f32, exact gather
    embt = jnp.transpose(emb).astype(jnp.bfloat16)            # (D, K) bf16, MXU operand
    e_sq = jnp.sum(emb * emb, axis=1, keepdims=True).T        # (1, K) f32, hoisted

    enc_bytes = jnp.dtype(encodings_dtype).itemsize
    cost = pl.CostEstimate(
        flops=4 * m_pad * k * d + 8 * m_pad * k,
        transcendentals=0,
        bytes_accessed=(m_pad * d * 4 * 2 + m_pad * k * enc_bytes
                        + k * d * 6 + k * 4 + num_tiles * 2 * k * 4),
    )

    q_pad, enc_pad, stats = pl.pallas_call(
        partial(_vq_kernel, m_valid=m),
        grid=(num_tiles,),
        in_specs=[
            pl.BlockSpec((tm, d), lambda i: (i, 0)),      # x tile
            pl.BlockSpec((k, d), lambda i: (0, 0)),       # embedding (f32)
            pl.BlockSpec((d, k), lambda i: (0, 0)),       # embedding^T (bf16)
            pl.BlockSpec((1, k), lambda i: (0, 0)),       # |e|^2
        ],
        out_specs=(
            pl.BlockSpec((tm, d), lambda i: (i, 0)),      # quantized tile
            pl.BlockSpec((tm, k), lambda i: (i, 0)),      # encodings tile
            pl.BlockSpec((1, 2, k), lambda i: (i, 0, 0)),  # per-tile partial stats
        ),
        out_shape=(
            jax.ShapeDtypeStruct((m_pad, d), jnp.float32),
            jax.ShapeDtypeStruct((m_pad, k), encodings_dtype),
            jax.ShapeDtypeStruct((num_tiles, 2, k), jnp.float32),
        ),
        compiler_params=pltpu.CompilerParams(dimension_semantics=("parallel",)),
        cost_estimate=cost,
    )(flat_p, emb, embt, e_sq)

    # Tiny final reductions (num_tiles x K) done in the wrapper so the grid axis
    # can stay "parallel" (both v7x TensorCores usable).
    hist = jnp.sum(stats[:, 0, :], axis=0)                    # (K,)
    sse = jnp.sum(stats[:, 1, 0])                             # scalar
    mse = sse / (m * d)
    loss = (1.0 + float(commitment_cost)) * mse
    avg_probs = hist / m
    perplexity = jnp.exp(-jnp.sum(avg_probs * jnp.log(avg_probs + 1e-10)))

    quantized = q_pad[:m].reshape(input_shape)
    encodings = enc_pad[:m]            # bf16; 0/1 exactly representable
    return loss, quantized, perplexity, encodings


# ----------------------------------------------------------------------------
# Self-check
# ----------------------------------------------------------------------------
if __name__ == "__main__":
    key = jax.random.PRNGKey(0)
    kx, ke = jax.random.split(key)

    num_embeddings, embedding_dim, commitment_cost = 128, 32, 0.25
    # VQ-VAE latents: NHWC with C == embedding_dim -> M = 2*8*8 = 128 vectors.
    inputs = jax.random.normal(kx, (2, 8, 8, embedding_dim), dtype=jnp.float32)
    embedding = jax.random.uniform(
        ke, (num_embeddings, embedding_dim), jnp.float32,
        -1.0 / num_embeddings, 1.0 / num_embeddings)

    fwd = jax.jit(partial(vector_quantizer_forward,
                          commitment_cost=commitment_cost))
    loss, quantized, perplexity, encodings = jax.block_until_ready(
        fwd(inputs, embedding))

    # ---- correctness checks -------------------------------------------------
    flat = inputs.reshape(-1, embedding_dim)
    m = flat.shape[0]

    assert quantized.shape == inputs.shape, quantized.shape
    assert encodings.shape == (m, num_embeddings), encodings.shape

    enc_f32 = encodings.astype(jnp.float32)
    # every row is a valid one-hot
    assert jnp.allclose(jnp.sum(enc_f32, axis=1), 1.0, atol=1e-6), "not one-hot"
    idx_k = jnp.argmax(enc_f32, axis=1)

    # full-precision reference distances; the bf16 distance matmul may flip the
    # argmin only between near-tied codes, so check (near-)optimality of the
    # selected code rather than bit-equality of indices.
    dist_ref = (jnp.sum(flat ** 2, axis=1, keepdims=True)
                + jnp.sum(embedding ** 2, axis=1)
                - 2.0 * flat @ embedding.T)
    d_sel = jnp.take_along_axis(dist_ref, idx_k[:, None], axis=1)[:, 0]
    d_opt = jnp.min(dist_ref, axis=1)
    assert jnp.all(d_sel <= d_opt + 1e-2), "selected code far from optimal"

    # quantized is an exact codebook gather of the selected indices
    assert jnp.allclose(quantized.reshape(-1, embedding_dim),
                        embedding[idx_k], atol=1e-6), "quantized gather mismatch"

    # loss / perplexity match exact f32 math for the selected indices
    q_sel = embedding[idx_k]
    loss_sel = (1.0 + commitment_cost) * jnp.mean((q_sel - flat) ** 2)
    avg = jnp.mean(jax.nn.one_hot(idx_k, num_embeddings, dtype=jnp.float32), axis=0)
    ppl_sel = jnp.exp(-jnp.sum(avg * jnp.log(avg + 1e-10)))
    assert jnp.allclose(loss, loss_sel, atol=1e-5, rtol=1e-5), "loss mismatch"
    assert jnp.allclose(perplexity, ppl_sel, atol=1e-4, rtol=1e-4), "perplexity mismatch"

    # loss also agrees with the full f32-argmin reference (near-tie flips change
    # it by at most ~tol / (M*D))
    idx_ref = jnp.argmin(dist_ref, axis=1)
    loss_ref = (1.0 + commitment_cost) * jnp.mean((embedding[idx_ref] - flat) ** 2)
    assert jnp.allclose(loss, loss_ref, atol=1e-3), "loss vs f32 reference mismatch"

    print("KERNEL_OK")
</pallas_src>

<mosaic_0001>
module attributes {stable_mosaic.version = 11 : i64} {
  func.func @_vq_kernel(%arg0: i32, %arg1: memref<128x32xf32, #tpu.memory_space<vmem>>, %arg2: memref<128x32xf32, #tpu.memory_space<vmem>>, %arg3: memref<32x128xbf16, #tpu.memory_space<vmem>>, %arg4: memref<1x128xf32, #tpu.memory_space<vmem>>, %arg5: memref<128x32xf32, #tpu.memory_space<vmem>>, %arg6: memref<128x128xbf16, #tpu.memory_space<vmem>>, %arg7: memref<1x2x128xf32, #tpu.memory_space<vmem>>) attributes {dimension_semantics = [#tpu.dimension_semantics<parallel>], iteration_bounds = array<i64: 1>, scalar_prefetch = 0 : i64, scratch_operands = 0 : i64, tpu.core_type = #tpu.core_type<tc>, window_params = [{transform_indices = @transform_0, window_bounds = array<i64: 128, 32>}, {pipeline_mode = #tpu.pipeline_mode<synchronous>, transform_indices = @transform_1, window_bounds = array<i64: 128, 32>}, {pipeline_mode = #tpu.pipeline_mode<synchronous>, transform_indices = @transform_2, window_bounds = array<i64: 32, 128>}, {pipeline_mode = #tpu.pipeline_mode<synchronous>, transform_indices = @transform_3, window_bounds = array<i64: 1, 128>}, {transform_indices = @transform_4, window_bounds = array<i64: 128, 32>}, {transform_indices = @transform_5, window_bounds = array<i64: 128, 128>}, {transform_indices = @transform_6, window_bounds = array<i64: 1, 2, 128>}]} {
    %c0 = arith.constant 0 : index
    %c0_0 = arith.constant 0 : index
    %0 = vector.load %arg1[%c0, %c0_0] : memref<128x32xf32, #tpu.memory_space<vmem>>, vector<128x32xf32>
    %c0_1 = arith.constant 0 : index
    %c0_2 = arith.constant 0 : index
    %1 = vector.load %arg4[%c0_1, %c0_2] : memref<1x128xf32, #tpu.memory_space<vmem>>, vector<1x128xf32>
    %2 = arith.truncf %0 : vector<128x32xf32> to vector<128x32xbf16>
    %c0_3 = arith.constant 0 : index
    %c0_4 = arith.constant 0 : index
    %3 = vector.load %arg3[%c0_3, %c0_4] : memref<32x128xbf16, #tpu.memory_space<vmem>>, vector<32x128xbf16>
    %cst = arith.constant dense<0.000000e+00> : vector<128x128xf32>
    %4 = tpu.matmul %2, %3, %cst {dimension_numbers = #tpu.dot_dimension_numbers<[1], [0], [0], [1], [0, 0, 1, 1], [], []>} : vector<128x32xbf16>, vector<32x128xbf16>, vector<128x128xf32> -> vector<128x128xf32>
    %cst_5 = arith.constant 2.000000e+00 : f32
    %5 = vector.broadcast %cst_5 : f32 to vector<128x128xf32>
    %6 = arith.mulf %5, %4 : vector<128x128xf32>
    %7 = vector.broadcast %1 : vector<1x128xf32> to vector<128x128xf32>
    %8 = arith.subf %7, %6 : vector<128x128xf32>
    %9 = tpu.iota {dimensions = array<i32: 1>} : vector<128x128xi32>
    %cst_6 = arith.constant dense<0x7F800000> : vector<128xf32>
    %10 = vector.multi_reduction <minimumf>, %8, %cst_6 [1] : vector<128x128xf32> to vector<128xf32>
    %11 = vector.shape_cast %10 : vector<128xf32> to vector<128x1xf32>
    %12 = vector.broadcast %11 : vector<128x1xf32> to vector<128x128xf32>
    %13 = arith.cmpf oeq, %8, %12 : vector<128x128xf32>
    %c128_i32 = arith.constant 128 : i32
    %14 = vector.broadcast %c128_i32 : i32 to vector<128x128xi32>
    %15 = arith.select %13, %9, %14 : vector<128x128xi1>, vector<128x128xi32>
    %cst_7 = arith.constant dense<2147483647> : vector<128xi32>
    %16 = vector.multi_reduction <minsi>, %15, %cst_7 [1] : vector<128x128xi32> to vector<128xi32>
    %17 = vector.shape_cast %16 : vector<128xi32> to vector<128x1xi32>
    %18 = vector.broadcast %17 : vector<128x1xi32> to vector<128x128xi32>
    %19 = arith.cmpi eq, %9, %18 : vector<128x128xi32>
    %20 = arith.extui %19 : vector<128x128xi1> to vector<128x128xi32>
    %21 = arith.sitofp %20 : vector<128x128xi32> to vector<128x128xf32>
    %22 = arith.truncf %21 : vector<128x128xf32> to vector<128x128xbf16>
    %c0_8 = arith.constant 0 : index
    %c0_9 = arith.constant 0 : index
    %23 = vector.load %arg6[%c0_8, %c0_9] : memref<128x128xbf16, #tpu.memory_space<vmem>>, vector<128x128xbf16>
    tpu.vector_store %arg6[%c0_8, %c0_9], %22 {strides = array<i32>} : memref<128x128xbf16, #tpu.memory_space<vmem>>, vector<128x128xbf16>,
    %c0_10 = arith.constant 0 : index
    %c0_11 = arith.constant 0 : index
    %24 = vector.load %arg2[%c0_10, %c0_11] : memref<128x32xf32, #tpu.memory_space<vmem>>, vector<128x32xf32>
    %cst_12 = arith.constant dense<0.000000e+00> : vector<128x32xf32>
    %25 = tpu.matmul %21, %24, %cst_12 {dimension_numbers = #tpu.dot_dimension_numbers<[1], [0], [0], [1], [0, 0, 1, 1], [], []>} : vector<128x128xf32>, vector<128x32xf32>, vector<128x32xf32> -> vector<128x32xf32>
    %c0_13 = arith.constant 0 : index
    %c0_14 = arith.constant 0 : index
    %26 = vector.load %arg5[%c0_13, %c0_14] : memref<128x32xf32, #tpu.memory_space<vmem>>, vector<128x32xf32>
    tpu.vector_store %arg5[%c0_13, %c0_14], %25 {strides = array<i32>} : memref<128x32xf32, #tpu.memory_space<vmem>>, vector<128x32xf32>,
    %c128_i32_15 = arith.constant 128 : i32
    %27 = arith.muli %arg0, %c128_i32_15 : i32
    %28 = tpu.iota {dimensions = array<i32: 0>} : vector<128x1xi32>
    %29 = vector.broadcast %27 : i32 to vector<128x1xi32>
    %30 = arith.addi %29, %28 : vector<128x1xi32>
    %c128_i32_16 = arith.constant 128 : i32
    %31 = vector.broadcast %c128_i32_16 : i32 to vector<128x1xi32>
    %32 = arith.cmpi slt, %30, %31 : vector<128x1xi32>
    %33 = arith.extui %32 : vector<128x1xi1> to vector<128x1xi32>
    %34 = arith.sitofp %33 : vector<128x1xi32> to vector<128x1xf32>
    %35 = arith.subf %25, %0 : vector<128x32xf32>
    %36 = arith.mulf %35, %35 : vector<128x32xf32>
    %37 = vector.broadcast %34 : vector<128x1xf32> to vector<128x32xf32>
    %38 = arith.mulf %36, %37 : vector<128x32xf32>
    %cst_17 = arith.constant dense<0.000000e+00> : vector<32xf32>
    %39 = vector.multi_reduction <add>, %38, %cst_17 [0] : vector<128x32xf32> to vector<32xf32>
    %40 = vector.shape_cast %39 : vector<32xf32> to vector<1x32xf32>
    %cst_18 = arith.constant dense<0.000000e+00> : vector<1xf32>
    %41 = vector.multi_reduction <add>, %40, %cst_18 [1] : vector<1x32xf32> to vector<1xf32>
    %42 = vector.shape_cast %41 : vector<1xf32> to vector<1x1xf32>
    %43 = vector.broadcast %34 : vector<128x1xf32> to vector<128x128xf32>
    %44 = arith.mulf %21, %43 : vector<128x128xf32>
    %cst_19 = arith.constant dense<0.000000e+00> : vector<128xf32>
    %45 = vector.multi_reduction <add>, %44, %cst_19 [0] : vector<128x128xf32> to vector<128xf32>
    %46 = vector.shape_cast %45 : vector<128xf32> to vector<1x128xf32>
    %47 = vector.shape_cast %42 : vector<1x1xf32> to vector<1x1xf32>
    %48 = vector.broadcast %47 : vector<1x1xf32> to vector<1x128xf32>
    %49 = tpu.concatenate %46, %48 in 0 : vector<1x128xf32>, vector<1x128xf32> -> vector<2x128xf32>
    %50 = vector.shape_cast %49 : vector<2x128xf32> to vector<1x2x128xf32>
    %c0_20 = arith.constant 0 : index
    %c0_21 = arith.constant 0 : index
    %c0_22 = arith.constant 0 : index
    %51 = vector.load %arg7[%c0_20, %c0_21, %c0_22] : memref<1x2x128xf32, #tpu.memory_space<vmem>>, vector<1x2x128xf32>
    tpu.vector_store %arg7[%c0_20, %c0_21, %c0_22], %50 {strides = array<i32>} : memref<1x2x128xf32, #tpu.memory_space<vmem>>, vector<1x2x128xf32>,
    return
  }
  func.func @transform_0(%arg0: i32) -> (i32, i32) {
    %c0_i32 = arith.constant 0 : i32
    %c0_i32_0 = arith.constant 0 : i32
    return %arg0, %c0_i32 : i32, i32
  }
  func.func @transform_1(%arg0: i32) -> (i32, i32) {
    %c0_i32 = arith.constant 0 : i32
    %c0_i32_0 = arith.constant 0 : i32
    %c0_i32_1 = arith.constant 0 : i32
    return %c0_i32, %c0_i32_0 : i32, i32
  }
  func.func @transform_2(%arg0: i32) -> (i32, i32) {
    %c0_i32 = arith.constant 0 : i32
    %c0_i32_0 = arith.constant 0 : i32
    %c0_i32_1 = arith.constant 0 : i32
    return %c0_i32, %c0_i32_0 : i32, i32
  }
  func.func @transform_3(%arg0: i32) -> (i32, i32) {
    %c0_i32 = arith.constant 0 : i32
    %c0_i32_0 = arith.constant 0 : i32
    %c0_i32_1 = arith.constant 0 : i32
    return %c0_i32, %c0_i32_0 : i32, i32
  }
  func.func @transform_4(%arg0: i32) -> (i32, i32) {
    %c0_i32 = arith.constant 0 : i32
    %c0_i32_0 = arith.constant 0 : i32
    return %arg0, %c0_i32 : i32, i32
  }
  func.func @transform_5(%arg0: i32) -> (i32, i32) {
    %c0_i32 = arith.constant 0 : i32
    %c0_i32_0 = arith.constant 0 : i32
    return %arg0, %c0_i32 : i32, i32
  }
  func.func @transform_6(%arg0: i32) -> (i32, i32, i32) {
    %c0_i32 = arith.constant 0 : i32
    %c0_i32_0 = arith.constant 0 : i32
    %c0_i32_1 = arith.constant 0 : i32
    return %arg0, %c0_i32, %c0_i32_0 : i32, i32, i32
  }
}

</mosaic_0001>

<llo_original>
// kernel: vector_quantizer_forward.1
$region0: #{vector_quantizer_forward.1}
  #allocation0 [shape = 'u32[]', space=smem, size = 0x4, offset = 0x4, fixed_abs, tag = 'smem constant byte address 0x4 - core index']
  #allocation1 [shape = 'u32[144,128]{1,0:T(1,128)}', space=vmem, size = 0x12000, scoped, tag = 'internal scratch']
  %s0 = inlined_call_operand.vmem [shape: f32[128,32], index: 0, kind: input, shape index: {}]
  %s1 = inlined_call_operand.vmem [shape: f32[128,32], index: 1, kind: input, shape index: {}]
  %s2 = inlined_call_operand.vmem [shape: bf16[32,128], index: 2, kind: input, shape index: {}]
  %s3 = inlined_call_operand.vmem [shape: f32[1,128], index: 3, kind: input, shape index: {}]
  %s4 = inlined_call_operand.hbm [shape: f32[128,32], index: 4, kind: output, shape index: {0}]
  %s5 = inlined_call_operand.hbm [shape: bf16[128,128], index: 5, kind: output, shape index: {1}]
  %s6 = inlined_call_operand.vmem [shape: f32[1,2,128], index: 6, kind: output, shape index: {2}]
  %7 = xla_tuple %s4, %s5, %s6
  %s8 = sld [smem:[#allocation0]]
  $region42: #{vector_quantizer_forward.1} parent=0
    _
  %s10 = ssub.s32 1, %s8
  %s11 = scalar_select 0, %s10, %s8
  $region1: #{vector_quantizer_forward.1} parent=0
    #allocation2 [shape = 'u8[65536]{0}', space=vmem, size = 0x10000, scoped, tag = 'output window, operand 0, single buffered']
    #allocation3 [shape = 's32[1]{0}', space=sflag, size = 0x4, scoped, tag = 'scoped memory for vector_quantizer_forward.1']
    #allocation4 [shape = 'u8[32768]{0}', space=vmem, size = 0x8000, scoped, tag = 'output window, operand 1, single buffered']
    #allocation5 [shape = 's32[1]{0}', space=sflag, size = 0x4, scoped, tag = 'scoped memory for vector_quantizer_forward.1']
    %12 = vsyncpa [#allocation3], 0
    %13 = vsyncpa [#allocation5], 0
    // Predicated region
    $region2: #{vector_quantizer_forward.1} parent=1 // pred_check
      _
    $region3: #{vector_quantizer_forward.1} parent=1 // pred_check_branch
      %15 = sbr.rel (0) target = $region5
    $region4: #{vector_quantizer_forward.1} parent=1 // pred_region
      _
    $region5: #{vector_quantizer_forward.1} parent=1 // pred_fallthru
      _
    // Predicated region
    $region6: #{vector_quantizer_forward.1} parent=1 // pred_check
      _
    $region7: #{vector_quantizer_forward.1} parent=1 // pred_check_branch
      %17 = sbr.rel (0) target = $region9
    $region8: #{vector_quantizer_forward.1} parent=1 // pred_region
      _
    $region9: #{vector_quantizer_forward.1} parent=1 // pred_fallthru
      _
    // Predicated region
    $region10: #{vector_quantizer_forward.1} parent=1 // pred_check
      _
    $region11: #{vector_quantizer_forward.1} parent=1 // pred_check_branch
      %19 = sbr.rel (0) target = $region13
    $region12: #{vector_quantizer_forward.1} parent=1 // pred_region
      _
    $region13: #{vector_quantizer_forward.1} parent=1 // pred_fallthru
      _
    // Predicated region
    $region14: #{vector_quantizer_forward.1} parent=1 // pred_check
      _
    $region15: #{vector_quantizer_forward.1} parent=1 // pred_check_branch
      %21 = sbr.rel (0) target = $region17
    $region16: #{vector_quantizer_forward.1} parent=1 // pred_region
      _
    $region17: #{vector_quantizer_forward.1} parent=1 // pred_fallthru
      _
    %v23 = vld [vmem:[%s0] sm:$0xff]
    %v24 = vld [vmem:[%s0 + $0x8] sm:$0xff]
    %v25 = vld [vmem:[%s0 + $0x10] sm:$0xff]
    %v26 = vld [vmem:[%s0 + $0x18] sm:$0xff]
    %v27 = vld [vmem:[%s0 + $0x20] sm:$0xff]
    %v28 = vld [vmem:[%s0 + $0x28] sm:$0xff]
    %v29 = vld [vmem:[%s0 + $0x30] sm:$0xff]
    %v30 = vld [vmem:[%s0 + $0x38] sm:$0xff]
    %v31 = vld [vmem:[%s0 + $0x40] sm:$0xff]
    %v32 = vld [vmem:[%s0 + $0x48] sm:$0xff]
    %v33 = vld [vmem:[%s0 + $0x50] sm:$0xff]
    %v34 = vld [vmem:[%s0 + $0x58] sm:$0xff]
    %v35 = vld [vmem:[%s0 + $0x60] sm:$0xff]
    %v36 = vld [vmem:[%s0 + $0x68] sm:$0xff]
    %v37 = vld [vmem:[%s0 + $0x70] sm:$0xff]
    %v38 = vld [vmem:[%s0 + $0x78] sm:$0xff]
    %v39 = vld [vmem:[%s3] sm:$0x1]
    %v40 = vpack.c.bf16 %v24, %v23
    %v41 = vpack.c.bf16 %v26, %v25
    %v42 = vpack.c.bf16 %v28, %v27
    %v43 = vpack.c.bf16 %v30, %v29
    %v44 = vpack.c.bf16 %v32, %v31
    %v45 = vpack.c.bf16 %v34, %v33
    %v46 = vpack.c.bf16 %v36, %v35
    %v47 = vpack.c.bf16 %v38, %v37
    %v48 = vld [vmem:[%s2] sm:$0xf]
    %v49 = vld [vmem:[%s2 + $0x4] sm:$0xf]
    %v50 = vld [vmem:[%s2 + $0x8] sm:$0xf]
    %v51 = vld [vmem:[%s2 + $0xc] sm:$0xf]
    %v56 = vunpack.c.l.b16 %v48
    %v57 = vunpack.c.l.b16 %v49
    %v58 = vunpack.c.l.b16 %v50
    %v59 = vunpack.c.l.b16 %v51
    %v60 = vpack.c.b16 %v57, %v56
    %v61 = vpack.c.b16 %v59, %v58
    %vm64 = vcmask 261120
    %v66 = vsel %vm64, %v40, 0
    %v69 = vsel %vm64, %v41, 0
    %v72 = vsel %vm64, %v42, 0
    %v75 = vsel %vm64, %v43, 0
    %v78 = vsel %vm64, %v44, 0
    %v81 = vsel %vm64, %v45, 0
    %v84 = vsel %vm64, %v46, 0
    %v87 = vsel %vm64, %v47, 0
    %89 = vmatprep.subr.bf16.mxu0 0
    %90 = vmatpush1.bf16.msra.mxu0 %v60
    %91 = vmatprep.subr.bf16.mxu0 0
    %92 = vmatpush1.bf16.msra.mxu0 %v61
    %93 = vmatprep.subr.bf16.mxu0 0
    %94 = vmatpush1.bf16.msra.mxu0 0
    %95 = vmatprep.subr.bf16.mxu0 0
    %96 = vmatpush1.bf16.msra.mxu0 0
    %97 = vmatprep.subr.bf16.mxu0 0
    %98 = vmatpush1.bf16.msra.mxu0 0
    %99 = vmatprep.subr.bf16.mxu0 0
    %100 = vmatpush1.bf16.msra.mxu0 0
    %101 = vmatprep.subr.bf16.mxu0 0
    %102 = vmatpush1.bf16.msra.mxu0 0
    %103 = vmatprep.subr.bf16.mxu0 0
    %104 = vmatpush1.bf16.msra.mxu0 0
    %105 = vmatprep.subr.bf16.mxu0 0
    %106 = vmatpush1.bf16.msra.mxu0 0
    %107 = vmatprep.subr.bf16.mxu0 0
    %108 = vmatpush1.bf16.msra.mxu0 0
    %109 = vmatprep.subr.bf16.mxu0 0
    %110 = vmatpush1.bf16.msra.mxu0 0
    %111 = vmatprep.subr.bf16.mxu0 0
    %112 = vmatpush1.bf16.msra.mxu0 0
    %113 = vmatprep.subr.bf16.mxu0 0
    %114 = vmatpush1.bf16.msra.mxu0 0
    %115 = vmatprep.subr.bf16.mxu0 0
    %116 = vmatpush1.bf16.msra.mxu0 0
    %117 = vmatprep.subr.bf16.mxu0 0
    %118 = vmatpush1.bf16.msra.mxu0 0
    %119 = vmatprep.subr.bf16.mxu0 0
    %120 = vmatpush1.bf16.msra.mxu0 0
    %121 = vmatprep.mubr.bf16.mxu0 0
    %122 = vmatmul.mubr.bf16.gmra.mrb[0].mxu0 %v66
    %v123 = vpop.f32.mrb[0].mxu0
    %v124 = vadd.f32 0.0, %v123
    %v125 = vpop.f32.mrb[0].mxu0
    %v126 = vpop.f32.mrb[0].mxu0
    %v127 = vadd.f32 0.0, %v126
    %v128 = vpop.f32.mrb[0].mxu0
    %129 = vmatprep.mubr.bf16.mxu0 0
    %130 = vmatmul.mubr.bf16.gmra.mrb[0].mxu0 %v69
    %v131 = vpop.f32.mrb[0].mxu0
    %v132 = vadd.f32 0.0, %v131
    %v133 = vpop.f32.mrb[0].mxu0
    %v134 = vpop.f32.mrb[0].mxu0
    %v135 = vadd.f32 0.0, %v134
    %v136 = vpop.f32.mrb[0].mxu0
    %137 = vmatprep.mubr.bf16.mxu0 0
    %138 = vmatmul.mubr.bf16.gmra.mrb[0].mxu0 %v72
    %v139 = vpop.f32.mrb[0].mxu0
    %v140 = vadd.f32 0.0, %v139
    %v141 = vpop.f32.mrb[0].mxu0
    %v142 = vpop.f32.mrb[0].mxu0
    %v143 = vadd.f32 0.0, %v142
    %v144 = vpop.f32.mrb[0].mxu0
    %145 = vmatprep.mubr.bf16.mxu0 0
    %146 = vmatmul.mubr.bf16.gmra.mrb[0].mxu0 %v75
    %v147 = vpop.f32.mrb[0].mxu0
    %v148 = vadd.f32 0.0, %v147
    %v149 = vpop.f32.mrb[0].mxu0
    %v150 = vpop.f32.mrb[0].mxu0
    %v151 = vadd.f32 0.0, %v150
    %v152 = vpop.f32.mrb[0].mxu0
    %153 = vmatprep.mubr.bf16.mxu0 0
    %154 = vmatmul.mubr.bf16.gmra.mrb[0].mxu0 %v78
    %v155 = vpop.f32.mrb[0].mxu0
    %v156 = vadd.f32 0.0, %v155
    %v157 = vpop.f32.mrb[0].mxu0
    %v158 = vpop.f32.mrb[0].mxu0
    %v159 = vadd.f32 0.0, %v158
    %v160 = vpop.f32.mrb[0].mxu0
    %161 = vmatprep.mubr.bf16.mxu0 0
    %162 = vmatmul.mubr.bf16.gmra.mrb[0].mxu0 %v81
    %v163 = vpop.f32.mrb[0].mxu0
    %v164 = vadd.f32 0.0, %v163
    %v165 = vpop.f32.mrb[0].mxu0
    %v166 = vpop.f32.mrb[0].mxu0
    %v167 = vadd.f32 0.0, %v166
    %v168 = vpop.f32.mrb[0].mxu0
    %169 = vmatprep.mubr.bf16.mxu0 0
    %170 = vmatmul.mubr.bf16.gmra.mrb[0].mxu0 %v84
    %v171 = vpop.f32.mrb[0].mxu0
    %v172 = vadd.f32 0.0, %v171
    %v173 = vpop.f32.mrb[0].mxu0
    %v174 = vpop.f32.mrb[0].mxu0
    %v175 = vadd.f32 0.0, %v174
    %v176 = vpop.f32.mrb[0].mxu0
    %177 = vmatprep.mubr.bf16.mxu0 0
    %178 = vmatmul.mubr.bf16.gmra.mrb[0].mxu0 %v87
    %v179 = vpop.f32.mrb[0].mxu0
    %v180 = vadd.f32 0.0, %v179
    %v181 = vpop.f32.mrb[0].mxu0
    %v182 = vpop.f32.mrb[0].mxu0
    %v183 = vadd.f32 0.0, %v182
    %v184 = vpop.f32.mrb[0].mxu0
    %185 = vdwg.mxu0
    %v186 = vmul.f32 %v124, 2.0
    %v187 = vmul.f32 %v127, 2.0
    %v188 = vmul.f32 %v132, 2.0
    %v189 = vmul.f32 %v135, 2.0
    %v190 = vmul.f32 %v140, 2.0
    %v191 = vmul.f32 %v143, 2.0
    %v192 = vmul.f32 %v148, 2.0
    %v193 = vmul.f32 %v151, 2.0
    %v194 = vmul.f32 %v156, 2.0
    %v195 = vmul.f32 %v159, 2.0
    %v196 = vmul.f32 %v164, 2.0
    %v197 = vmul.f32 %v167, 2.0
    %v198 = vmul.f32 %v172, 2.0
    %v199 = vmul.f32 %v175, 2.0
    %v200 = vmul.f32 %v180, 2.0
    %v201 = vmul.f32 %v183, 2.0
    %v203 = vlaneseq
    %v204 = vshrl.u32 %v203, 7
    %v205 = vsub.s32 0, %v204
    %v206 = vrot.slane %v39, %v205
    %v208 = vsub.f32 %v206, %v186
    %v209 = vsub.f32 %v206, %v187
    %v210 = vsub.f32 %v206, %v188
    %v211 = vsub.f32 %v206, %v189
    %v212 = vsub.f32 %v206, %v190
    %v213 = vsub.f32 %v206, %v191
    %v214 = vsub.f32 %v206, %v192
    %v215 = vsub.f32 %v206, %v193
    %v216 = vsub.f32 %v206, %v194
    %v217 = vsub.f32 %v206, %v195
    %v218 = vsub.f32 %v206, %v196
    %v219 = vsub.f32 %v206, %v197
    %v220 = vsub.f32 %v206, %v198
    %v221 = vsub.f32 %v206, %v199
    %v222 = vsub.f32 %v206, %v200
    %v223 = vsub.f32 %v206, %v201
    %v224 = vlaneseq
    %v225 = vand.u32 %v224, 127
    %226 = vmin.xlane.f32.xlu0 %v208
    %v227 = vpop.xlane.xlu0 %226
    %228 = vmin.xlane.f32.xlu0 %v209
    %v229 = vpop.xlane.xlu0 %228
    %230 = vmin.xlane.f32.xlu0 %v210
    %v231 = vpop.xlane.xlu0 %230
    %232 = vmin.xlane.f32.xlu0 %v211
    %v233 = vpop.xlane.xlu0 %232
    %234 = vmin.xlane.f32.xlu0 %v212
    %v235 = vpop.xlane.xlu0 %234
    %236 = vmin.xlane.f32.xlu0 %v213
    %v237 = vpop.xlane.xlu0 %236
    %238 = vmin.xlane.f32.xlu0 %v214
    %v239 = vpop.xlane.xlu0 %238
    %240 = vmin.xlane.f32.xlu0 %v215
    %v241 = vpop.xlane.xlu0 %240
    %242 = vmin.xlane.f32.xlu0 %v216
    %v243 = vpop.xlane.xlu0 %242
    %244 = vmin.xlane.f32.xlu0 %v217
    %v245 = vpop.xlane.xlu0 %244
    %246 = vmin.xlane.f32.xlu0 %v218
    %v247 = vpop.xlane.xlu0 %246
    %248 = vmin.xlane.f32.xlu0 %v219
    %v249 = vpop.xlane.xlu0 %248
    %250 = vmin.xlane.f32.xlu0 %v220
    %v251 = vpop.xlane.xlu0 %250
    %252 = vmin.xlane.f32.xlu0 %v221
    %v253 = vpop.xlane.xlu0 %252
    %254 = vmin.xlane.f32.xlu0 %v222
    %v255 = vpop.xlane.xlu0 %254
    %256 = vmin.xlane.f32.xlu0 %v223
    %v257 = vpop.xlane.xlu0 %256
    %vm258 = vcmp.eq.f32.partialorder %v208, %v227
    %vm259 = vcmp.eq.f32.partialorder %v209, %v229
    %vm260 = vcmp.eq.f32.partialorder %v210, %v231
    %vm261 = vcmp.eq.f32.partialorder %v211, %v233
    %vm262 = vcmp.eq.f32.partialorder %v212, %v235
    %vm263 = vcmp.eq.f32.partialorder %v213, %v237
    %vm264 = vcmp.eq.f32.partialorder %v214, %v239
    %vm265 = vcmp.eq.f32.partialorder %v215, %v241
    %vm266 = vcmp.eq.f32.partialorder %v216, %v243
    %vm267 = vcmp.eq.f32.partialorder %v217, %v245
    %vm268 = vcmp.eq.f32.partialorder %v218, %v247
    %vm269 = vcmp.eq.f32.partialorder %v219, %v249
    %vm270 = vcmp.eq.f32.partialorder %v220, %v251
    %vm271 = vcmp.eq.f32.partialorder %v221, %v253
    %vm272 = vcmp.eq.f32.partialorder %v222, %v255
    %vm273 = vcmp.eq.f32.partialorder %v223, %v257
    %v274 = vsel %vm258, %v225, 128
    %v275 = vsel %vm259, %v225, 128
    %v276 = vsel %vm260, %v225, 128
    %v277 = vsel %vm261, %v225, 128
    %v278 = vsel %vm262, %v225, 128
    %v279 = vsel %vm263, %v225, 128
    %v280 = vsel %vm264, %v225, 128
    %v281 = vsel %vm265, %v225, 128
    %v282 = vsel %vm266, %v225, 128
    %v283 = vsel %vm267, %v225, 128
    %v284 = vsel %vm268, %v225, 128
    %v285 = vsel %vm269, %v225, 128
    %v286 = vsel %vm270, %v225, 128
    %v287 = vsel %vm271, %v225, 128
    %v288 = vsel %vm272, %v225, 128
    %v289 = vsel %vm273, %v225, 128
    %v290 = vand.u32 %v274, 65535
    %v291 = vshra.s32 %v274, 16
    %v292 = vcvt.s32.f32 %v290
    %v293 = vcvt.s32.f32 %v291
    %294 = vmin.xlane.f32.xlu0 %v293
    %v295 = vpop.xlane.xlu0 %294
    %vm296 = vcmp.eq.f32.partialorder %v293, %v295
    %v297 = vsel %vm296, %v292, inf
    %298 = vmin.xlane.f32.xlu0 %v297
    %v299 = vpop.xlane.xlu0 %298
    %v300 = vcvt.f32.s32 %v299
    %v301 = vcvt.f32.s32 %v295
    %v302 = vshll.u32 %v301, 16
    %v303 = vadd.s32 %v302, %v300
    %v304 = vand.u32 %v275, 65535
    %v305 = vshra.s32 %v275, 16
    %v306 = vcvt.s32.f32 %v304
    %v307 = vcvt.s32.f32 %v305
    %308 = vmin.xlane.f32.xlu0 %v307
    %v309 = vpop.xlane.xlu0 %308
    %vm310 = vcmp.eq.f32.partialorder %v307, %v309
    %v311 = vsel %vm310, %v306, inf
    %312 = vmin.xlane.f32.xlu0 %v311
    %v313 = vpop.xlane.xlu0 %312
    %v314 = vcvt.f32.s32 %v313
    %v315 = vcvt.f32.s32 %v309
    %v316 = vshll.u32 %v315, 16
    %v317 = vadd.s32 %v316, %v314
    %v318 = vand.u32 %v276, 65535
    %v319 = vshra.s32 %v276, 16
    %v320 = vcvt.s32.f32 %v318
    %v321 = vcvt.s32.f32 %v319
    %322 = vmin.xlane.f32.xlu0 %v321
    %v323 = vpop.xlane.xlu0 %322
    %vm324 = vcmp.eq.f32.partialorder %v321, %v323
    %v325 = vsel %vm324, %v320, inf
    %326 = vmin.xlane.f32.xlu0 %v325
    %v327 = vpop.xlane.xlu0 %326
    %v328 = vcvt.f32.s32 %v327
    %v329 = vcvt.f32.s32 %v323
    %v330 = vshll.u32 %v329, 16
    %v331 = vadd.s32 %v330, %v328
    %v332 = vand.u32 %v277, 65535
    %v333 = vshra.s32 %v277, 16
    %v334 = vcvt.s32.f32 %v332
    %v335 = vcvt.s32.f32 %v333
    %336 = vmin.xlane.f32.xlu0 %v335
    %v337 = vpop.xlane.xlu0 %336
    %vm338 = vcmp.eq.f32.partialorder %v335, %v337
    %v339 = vsel %vm338, %v334, inf
    %340 = vmin.xlane.f32.xlu0 %v339
    %v341 = vpop.xlane.xlu0 %340
    %v342 = vcvt.f32.s32 %v341
    %v343 = vcvt.f32.s32 %v337
    %v344 = vshll.u32 %v343, 16
    %v345 = vadd.s32 %v344, %v342
    %v346 = vand.u32 %v278, 65535
    %v347 = vshra.s32 %v278, 16
    %v348 = vcvt.s32.f32 %v346
    %v349 = vcvt.s32.f32 %v347
    %350 = vmin.xlane.f32.xlu0 %v349
    %v351 = vpop.xlane.xlu0 %350
    %vm352 = vcmp.eq.f32.partialorder %v349, %v351
    %v353 = vsel %vm352, %v348, inf
    %354 = vmin.xlane.f32.xlu0 %v353
    %v355 = vpop.xlane.xlu0 %354
    %v356 = vcvt.f32.s32 %v355
    %v357 = vcvt.f32.s32 %v351
    %v358 = vshll.u32 %v357, 16
    %v359 = vadd.s32 %v358, %v356
    %v360 = vand.u32 %v279, 65535
    %v361 = vshra.s32 %v279, 16
    %v362 = vcvt.s32.f32 %v360
    %v363 = vcvt.s32.f32 %v361
    %364 = vmin.xlane.f32.xlu0 %v363
    %v365 = vpop.xlane.xlu0 %364
    %vm366 = vcmp.eq.f32.partialorder %v363, %v365
    %v367 = vsel %vm366, %v362, inf
    %368 = vmin.xlane.f32.xlu0 %v367
    %v369 = vpop.xlane.xlu0 %368
    %v370 = vcvt.f32.s32 %v369
    %v371 = vcvt.f32.s32 %v365
    %v372 = vshll.u32 %v371, 16
    %v373 = vadd.s32 %v372, %v370
    %v374 = vand.u32 %v280, 65535
    %v375 = vshra.s32 %v280, 16
    %v376 = vcvt.s32.f32 %v374
    %v377 = vcvt.s32.f32 %v375
    %378 = vmin.xlane.f32.xlu0 %v377
    %v379 = vpop.xlane.xlu0 %378
    %vm380 = vcmp.eq.f32.partialorder %v377, %v379
    %v381 = vsel %vm380, %v376, inf
    %382 = vmin.xlane.f32.xlu0 %v381
    %v383 = vpop.xlane.xlu0 %382
    %v384 = vcvt.f32.s32 %v383
    %v385 = vcvt.f32.s32 %v379
    %v386 = vshll.u32 %v385, 16
    %v387 = vadd.s32 %v386, %v384
    %v388 = vand.u32 %v281, 65535
    %v389 = vshra.s32 %v281, 16
    %v390 = vcvt.s32.f32 %v388
    %v391 = vcvt.s32.f32 %v389
    %392 = vmin.xlane.f32.xlu0 %v391
    %v393 = vpop.xlane.xlu0 %392
    %vm394 = vcmp.eq.f32.partialorder %v391, %v393
    %v395 = vsel %vm394, %v390, inf
    %396 = vmin.xlane.f32.xlu0 %v395
    %v397 = vpop.xlane.xlu0 %396
    %v398 = vcvt.f32.s32 %v397
    %v399 = vcvt.f32.s32 %v393
    %v400 = vshll.u32 %v399, 16
    %v401 = vadd.s32 %v400, %v398
    %v402 = vand.u32 %v282, 65535
    %v403 = vshra.s32 %v282, 16
    %v404 = vcvt.s32.f32 %v402
    %v405 = vcvt.s32.f32 %v403
    %406 = vmin.xlane.f32.xlu0 %v405
    %v407 = vpop.xlane.xlu0 %406
    %vm408 = vcmp.eq.f32.partialorder %v405, %v407
    %v409 = vsel %vm408, %v404, inf
    %410 = vmin.xlane.f32.xlu0 %v409
    %v411 = vpop.xlane.xlu0 %410
    %v412 = vcvt.f32.s32 %v411
    %v413 = vcvt.f32.s32 %v407
    %v414 = vshll.u32 %v413, 16
    %v415 = vadd.s32 %v414, %v412
    %v416 = vand.u32 %v283, 65535
    %v417 = vshra.s32 %v283, 16
    %v418 = vcvt.s32.f32 %v416
    %v419 = vcvt.s32.f32 %v417
    %420 = vmin.xlane.f32.xlu0 %v419
    %v421 = vpop.xlane.xlu0 %420
    %vm422 = vcmp.eq.f32.partialorder %v419, %v421
    %v423 = vsel %vm422, %v418, inf
    %424 = vmin.xlane.f32.xlu0 %v423
    %v425 = vpop.xlane.xlu0 %424
    %v426 = vcvt.f32.s32 %v425
    %v427 = vcvt.f32.s32 %v421
    %v428 = vshll.u32 %v427, 16
    %v429 = vadd.s32 %v428, %v426
    %v430 = vand.u32 %v284, 65535
    %v431 = vshra.s32 %v284, 16
    %v432 = vcvt.s32.f32 %v430
    %v433 = vcvt.s32.f32 %v431
    %434 = vmin.xlane.f32.xlu0 %v433
    %v435 = vpop.xlane.xlu0 %434
    %vm436 = vcmp.eq.f32.partialorder %v433, %v435
    %v437 = vsel %vm436, %v432, inf
    %438 = vmin.xlane.f32.xlu0 %v437
    %v439 = vpop.xlane.xlu0 %438
    %v440 = vcvt.f32.s32 %v439
    %v441 = vcvt.f32.s32 %v435
    %v442 = vshll.u32 %v441, 16
    %v443 = vadd.s32 %v442, %v440
    %v444 = vand.u32 %v285, 65535
    %v445 = vshra.s32 %v285, 16
    %v446 = vcvt.s32.f32 %v444
    %v447 = vcvt.s32.f32 %v445
    %448 = vmin.xlane.f32.xlu0 %v447
    %v449 = vpop.xlane.xlu0 %448
    %vm450 = vcmp.eq.f32.partialorder %v447, %v449
    %v451 = vsel %vm450, %v446, inf
    %452 = vmin.xlane.f32.xlu0 %v451
    %v453 = vpop.xlane.xlu0 %452
    %v454 = vcvt.f32.s32 %v453
    %v455 = vcvt.f32.s32 %v449
    %v456 = vshll.u32 %v455, 16
    %v457 = vadd.s32 %v456, %v454
    %v458 = vand.u32 %v286, 65535
    %v459 = vshra.s32 %v286, 16
    %v460 = vcvt.s32.f32 %v458
    %v461 = vcvt.s32.f32 %v459
    %462 = vmin.xlane.f32.xlu0 %v461
    %v463 = vpop.xlane.xlu0 %462
    %vm464 = vcmp.eq.f32.partialorder %v461, %v463
    %v465 = vsel %vm464, %v460, inf
    %466 = vmin.xlane.f32.xlu0 %v465
    %v467 = vpop.xlane.xlu0 %466
    %v468 = vcvt.f32.s32 %v467
    %v469 = vcvt.f32.s32 %v463
    %v470 = vshll.u32 %v469, 16
    %v471 = vadd.s32 %v470, %v468
    %v472 = vand.u32 %v287, 65535
    %v473 = vshra.s32 %v287, 16
    %v474 = vcvt.s32.f32 %v472
    %v475 = vcvt.s32.f32 %v473
    %476 = vmin.xlane.f32.xlu0 %v475
    %v477 = vpop.xlane.xlu0 %476
    %vm478 = vcmp.eq.f32.partialorder %v475, %v477
    %v479 = vsel %vm478, %v474, inf
    %480 = vmin.xlane.f32.xlu0 %v479
    %v481 = vpop.xlane.xlu0 %480
    %v482 = vcvt.f32.s32 %v481
    %v483 = vcvt.f32.s32 %v477
    %v484 = vshll.u32 %v483, 16
    %v485 = vadd.s32 %v484, %v482
    %v486 = vand.u32 %v288, 65535
    %v487 = vshra.s32 %v288, 16
    %v488 = vcvt.s32.f32 %v486
    %v489 = vcvt.s32.f32 %v487
    %490 = vmin.xlane.f32.xlu0 %v489
    %v491 = vpop.xlane.xlu0 %490
    %vm492 = vcmp.eq.f32.partialorder %v489, %v491
    %v493 = vsel %vm492, %v488, inf
    %494 = vmin.xlane.f32.xlu0 %v493
    %v495 = vpop.xlane.xlu0 %494
    %v496 = vcvt.f32.s32 %v495
    %v497 = vcvt.f32.s32 %v491
    %v498 = vshll.u32 %v497, 16
    %v499 = vadd.s32 %v498, %v496
    %v500 = vand.u32 %v289, 65535
    %v501 = vshra.s32 %v289, 16
    %v502 = vcvt.s32.f32 %v500
    %v503 = vcvt.s32.f32 %v501
    %504 = vmin.xlane.f32.xlu0 %v503
    %v505 = vpop.xlane.xlu0 %504
    %vm506 = vcmp.eq.f32.partialorder %v503, %v505
    %v507 = vsel %vm506, %v502, inf
    %508 = vmin.xlane.f32.xlu0 %v507
    %v509 = vpop.xlane.xlu0 %508
    %v510 = vcvt.f32.s32 %v509
    %v511 = vcvt.f32.s32 %v505
    %v512 = vshll.u32 %v511, 16
    %v513 = vadd.s32 %v512, %v510
    %vm514 = vcmp.eq.s32.totalorder %v225, %v303
    %vm515 = vcmp.eq.s32.totalorder %v225, %v317
    %vm516 = vcmp.eq.s32.totalorder %v225, %v331
    %vm517 = vcmp.eq.s32.totalorder %v225, %v345
    %vm518 = vcmp.eq.s32.totalorder %v225, %v359
    %vm519 = vcmp.eq.s32.totalorder %v225, %v373
    %vm520 = vcmp.eq.s32.totalorder %v225, %v387
    %vm521 = vcmp.eq.s32.totalorder %v225, %v401
    %vm522 = vcmp.eq.s32.totalorder %v225, %v415
    %vm523 = vcmp.eq.s32.totalorder %v225, %v429
    %vm524 = vcmp.eq.s32.totalorder %v225, %v443
    %vm525 = vcmp.eq.s32.totalorder %v225, %v457
    %vm526 = vcmp.eq.s32.totalorder %v225, %v471
    %vm527 = vcmp.eq.s32.totalorder %v225, %v485
    %vm528 = vcmp.eq.s32.totalorder %v225, %v499
    %vm529 = vcmp.eq.s32.totalorder %v225, %v513
    %v530 = vsel %vm514, 1, 0
    %v531 = vsel %vm515, 1, 0
    %v532 = vsel %vm516, 1, 0
    %v533 = vsel %vm517, 1, 0
    %v534 = vsel %vm518, 1, 0
    %v535 = vsel %vm519, 1, 0
    %v536 = vsel %vm520, 1, 0
    %v537 = vsel %vm521, 1, 0
    %v538 = vsel %vm522, 1, 0
    %v539 = vsel %vm523, 1, 0
    %v540 = vsel %vm524, 1, 0
    %v541 = vsel %vm525, 1, 0
    %v542 = vsel %vm526, 1, 0
    %v543 = vsel %vm527, 1, 0
    %v544 = vsel %vm528, 1, 0
    %v545 = vsel %vm529, 1, 0
    %v546 = vcvt.s32.f32 %v530
    %v547 = vcvt.s32.f32 %v531
    %v548 = vcvt.s32.f32 %v532
    %v549 = vcvt.s32.f32 %v533
    %v550 = vcvt.s32.f32 %v534
    %v551 = vcvt.s32.f32 %v535
    %v552 = vcvt.s32.f32 %v536
    %v553 = vcvt.s32.f32 %v537
    %v554 = vcvt.s32.f32 %v538
    %v555 = vcvt.s32.f32 %v539
    %v556 = vcvt.s32.f32 %v540
    %v557 = vcvt.s32.f32 %v541
    %v558 = vcvt.s32.f32 %v542
    %v559 = vcvt.s32.f32 %v543
    %v560 = vcvt.s32.f32 %v544
    %v561 = vcvt.s32.f32 %v545
    %v562 = vpack.c.bf16 %v547, %v546
    %v563 = vpack.c.bf16 %v549, %v548
    %v564 = vpack.c.bf16 %v551, %v550
    %v565 = vpack.c.bf16 %v553, %v552
    %v566 = vpack.c.bf16 %v555, %v554
    %v567 = vpack.c.bf16 %v557, %v556
    %v568 = vpack.c.bf16 %v559, %v558
    %v569 = vpack.c.bf16 %v561, %v560
    %v578 = vunpack.c.l.b16 %v562
    %v579 = vunpack.c.h.b16 %v562
    %v580 = vunpack.c.l.b16 %v563
    %v581 = vunpack.c.h.b16 %v563
    %v582 = vunpack.c.l.b16 %v564
    %v583 = vunpack.c.h.b16 %v564
    %v584 = vunpack.c.l.b16 %v565
    %v585 = vunpack.c.h.b16 %v565
    %v586 = vunpack.c.l.b16 %v566
    %v587 = vunpack.c.h.b16 %v566
    %v588 = vunpack.c.l.b16 %v567
    %v589 = vunpack.c.h.b16 %v567
    %v590 = vunpack.c.l.b16 %v568
    %v591 = vunpack.c.h.b16 %v568
    %v592 = vunpack.c.l.b16 %v569
    %v593 = vunpack.c.h.b16 %v569
    %v594 = vpack.c.b16 %v578, %v578
    %v595 = vpack.c.b16 %v579, %v579
    %v596 = vpack.c.b16 %v580, %v580
    %v597 = vpack.c.b16 %v581, %v581
    %v598 = vpack.c.b16 %v582, %v582
    %v599 = vpack.c.b16 %v583, %v583
    %v600 = vpack.c.b16 %v584, %v584
    %v601 = vpack.c.b16 %v585, %v585
    %v602 = vpack.c.b16 %v586, %v586
    %v603 = vpack.c.b16 %v587, %v587
    %v604 = vpack.c.b16 %v588, %v588
    %v605 = vpack.c.b16 %v589, %v589
    %v606 = vpack.c.b16 %v590, %v590
    %v607 = vpack.c.b16 %v591, %v591
    %v608 = vpack.c.b16 %v592, %v592
    %v609 = vpack.c.b16 %v593, %v593
    %626 = vst [vmem:[#allocation4] sm:$0xf] %v594
    %627 = vst [vmem:[#allocation4 + $0x4] sm:$0xf] %v595
    %628 = vst [vmem:[#allocation4 + $0x8] sm:$0xf] %v596
    %629 = vst [vmem:[#allocation4 + $0xc] sm:$0xf] %v597
    %630 = vst [vmem:[#allocation4 + $0x10] sm:$0xf] %v598
    %631 = vst [vmem:[#allocation4 + $0x14] sm:$0xf] %v599
    %632 = vst [vmem:[#allocation4 + $0x18] sm:$0xf] %v600
    %633 = vst [vmem:[#allocation4 + $0x1c] sm:$0xf] %v601
    %634 = vst [vmem:[#allocation4 + $0x20] sm:$0xf] %v602
    %635 = vst [vmem:[#allocation4 + $0x24] sm:$0xf] %v603
    %636 = vst [vmem:[#allocation4 + $0x28] sm:$0xf] %v604
    %637 = vst [vmem:[#allocation4 + $0x2c] sm:$0xf] %v605
    %638 = vst [vmem:[#allocation4 + $0x30] sm:$0xf] %v606
    %639 = vst [vmem:[#allocation4 + $0x34] sm:$0xf] %v607
    %640 = vst [vmem:[#allocation4 + $0x38] sm:$0xf] %v608
    %641 = vst [vmem:[#allocation4 + $0x3c] sm:$0xf] %v609
    %v642 = vld [vmem:[%s1] sm:$0xff]
    %v643 = vld [vmem:[%s1 + $0x8] sm:$0xff]
    %v644 = vld [vmem:[%s1 + $0x10] sm:$0xff]
    %v645 = vld [vmem:[%s1 + $0x18] sm:$0xff]
    %v646 = vld [vmem:[%s1 + $0x20] sm:$0xff]
    %v647 = vld [vmem:[%s1 + $0x28] sm:$0xff]
    %v648 = vld [vmem:[%s1 + $0x30] sm:$0xff]
    %v649 = vld [vmem:[%s1 + $0x38] sm:$0xff]
    %v650 = vld [vmem:[%s1 + $0x40] sm:$0xff]
    %v651 = vld [vmem:[%s1 + $0x48] sm:$0xff]
    %v652 = vld [vmem:[%s1 + $0x50] sm:$0xff]
    %v653 = vld [vmem:[%s1 + $0x58] sm:$0xff]
    %v654 = vld [vmem:[%s1 + $0x60] sm:$0xff]
    %v655 = vld [vmem:[%s1 + $0x68] sm:$0xff]
    %v656 = vld [vmem:[%s1 + $0x70] sm:$0xff]
    %v657 = vld [vmem:[%s1 + $0x78] sm:$0xff]
    %658 = vmatprep.subr.mxu0 0.0
    %659 = vmatpush1.msra.mxu0 %v642
    %660 = vmatprep.subr.mxu0 0.0
    %661 = vmatpush1.msra.mxu0 %v643
    %662 = vmatprep.subr.mxu0 0.0
    %663 = vmatpush1.msra.mxu0 %v644
    %664 = vmatprep.subr.mxu0 0.0
    %665 = vmatpush1.msra.mxu0 %v645
    %666 = vmatprep.subr.mxu0 0.0
    %667 = vmatpush1.msra.mxu0 %v646
    %668 = vmatprep.subr.mxu0 0.0
    %669 = vmatpush1.msra.mxu0 %v647
    %670 = vmatprep.subr.mxu0 0.0
    %671 = vmatpush1.msra.mxu0 %v648
    %672 = vmatprep.subr.mxu0 0.0
    %673 = vmatpush1.msra.mxu0 %v649
    %674 = vmatprep.subr.mxu0 0.0
    %675 = vmatpush1.msra.mxu0 %v650
    %676 = vmatprep.subr.mxu0 0.0
    %677 = vmatpush1.msra.mxu0 %v651
    %678 = vmatprep.subr.mxu0 0.0
    %679 = vmatpush1.msra.mxu0 %v652
    %680 = vmatprep.subr.mxu0 0.0
    %681 = vmatpush1.msra.mxu0 %v653
    %682 = vmatprep.subr.mxu0 0.0
    %683 = vmatpush1.msra.mxu0 %v654
    %684 = vmatprep.subr.mxu0 0.0
    %685 = vmatpush1.msra.mxu0 %v655
    %686 = vmatprep.subr.mxu0 0.0
    %687 = vmatpush1.msra.mxu0 %v656
    %688 = vmatprep.subr.mxu0 0.0
    %689 = vmatpush1.msra.mxu0 %v657
    %690 = vmatprep.subr.mxu0 0.0
    %691 = vmatpush1.msra.mxu0 0.0
    %692 = vmatprep.subr.mxu0 0.0
    %693 = vmatpush1.msra.mxu0 0.0
    %694 = vmatprep.subr.mxu0 0.0
    %695 = vmatpush1.msra.mxu0 0.0
    %696 = vmatprep.subr.mxu0 0.0
    %697 = vmatpush1.msra.mxu0 0.0
    %698 = vmatprep.subr.mxu0 0.0
    %699 = vmatpush1.msra.mxu0 0.0
    %700 = vmatprep.subr.mxu0 0.0
    %701 = vmatpush1.msra.mxu0 0.0
    %702 = vmatprep.subr.mxu0 0.0
    %703 = vmatpush1.msra.mxu0 0.0
    %704 = vmatprep.subr.mxu0 0.0
    %705 = vmatpush1.msra.mxu0 0.0
    %706 = vmatprep.subr.mxu0 0.0
    %707 = vmatpush1.msra.mxu0 0.0
    %708 = vmatprep.subr.mxu0 0.0
    %709 = vmatpush1.msra.mxu0 0.0
    %710 = vmatprep.subr.mxu0 0.0
    %711 = vmatpush1.msra.mxu0 0.0
    %712 = vmatprep.subr.mxu0 0.0
    %713 = vmatpush1.msra.mxu0 0.0
    %714 = vmatprep.subr.mxu0 0.0
    %715 = vmatpush1.msra.mxu0 0.0
    %716 = vmatprep.subr.mxu0 0.0
    %717 = vmatpush1.msra.mxu0 0.0
    %718 = vmatprep.subr.mxu0 0.0
    %719 = vmatpush1.msra.mxu0 0.0
    %720 = vmatprep.subr.mxu0 0.0
    %721 = vmatpush1.msra.mxu0 0.0
    %722 = vmatprep.mubr.f32.mxu0 0.0
    %723 = vmatmul.mubr.f32.gmra.mrb[0].mxu0 %v546
    %v724 = vpop.f32.mrb[0].mxu0
    %v725 = vadd.f32 0.0, %v724
    %v726 = vpop.f32.mrb[0].mxu0
    %727 = vmatprep.mubr.f32.mxu0 0.0
    %728 = vmatmul.mubr.f32.gmra.mrb[0].mxu0 %v547
    %v729 = vpop.f32.mrb[0].mxu0
    %v730 = vadd.f32 0.0, %v729
    %v731 = vpop.f32.mrb[0].mxu0
    %732 = vmatprep.mubr.f32.mxu0 0.0
    %733 = vmatmul.mubr.f32.gmra.mrb[0].mxu0 %v548
    %v734 = vpop.f32.mrb[0].mxu0
    %v735 = vadd.f32 0.0, %v734
    %v736 = vpop.f32.mrb[0].mxu0
    %737 = vmatprep.mubr.f32.mxu0 0.0
    %738 = vmatmul.mubr.f32.gmra.mrb[0].mxu0 %v549
    %v739 = vpop.f32.mrb[0].mxu0
    %v740 = vadd.f32 0.0, %v739
    %v741 = vpop.f32.mrb[0].mxu0
    %742 = vmatprep.mubr.f32.mxu0 0.0
    %743 = vmatmul.mubr.f32.gmra.mrb[0].mxu0 %v550
    %v744 = vpop.f32.mrb[0].mxu0
    %v745 = vadd.f32 0.0, %v744
    %v746 = vpop.f32.mrb[0].mxu0
    %747 = vmatprep.mubr.f32.mxu0 0.0
    %748 = vmatmul.mubr.f32.gmra.mrb[0].mxu0 %v551
    %v749 = vpop.f32.mrb[0].mxu0
    %v750 = vadd.f32 0.0, %v749
    %v751 = vpop.f32.mrb[0].mxu0
    %752 = vmatprep.mubr.f32.mxu0 0.0
    %753 = vmatmul.mubr.f32.gmra.mrb[0].mxu0 %v552
    %v754 = vpop.f32.mrb[0].mxu0
    %v755 = vadd.f32 0.0, %v754
    %v756 = vpop.f32.mrb[0].mxu0
    %757 = vmatprep.mubr.f32.mxu0 0.0
    %758 = vmatmul.mubr.f32.gmra.mrb[0].mxu0 %v553
    %v759 = vpop.f32.mrb[0].mxu0
    %v760 = vadd.f32 0.0, %v759
    %v761 = vpop.f32.mrb[0].mxu0
    %762 = vmatprep.mubr.f32.mxu0 0.0
    %763 = vmatmul.mubr.f32.gmra.mrb[0].mxu0 %v554
    %v764 = vpop.f32.mrb[0].mxu0
    %v765 = vadd.f32 0.0, %v764
    %v766 = vpop.f32.mrb[0].mxu0
    %767 = vmatprep.mubr.f32.mxu0 0.0
    %768 = vmatmul.mubr.f32.gmra.mrb[0].mxu0 %v555
    %v769 = vpop.f32.mrb[0].mxu0
    %v770 = vadd.f32 0.0, %v769
    %v771 = vpop.f32.mrb[0].mxu0
    %772 = vmatprep.mubr.f32.mxu0 0.0
    %773 = vmatmul.mubr.f32.gmra.mrb[0].mxu0 %v556
    %v774 = vpop.f32.mrb[0].mxu0
    %v775 = vadd.f32 0.0, %v774
    %v776 = vpop.f32.mrb[0].mxu0
    %777 = vmatprep.mubr.f32.mxu0 0.0
    %778 = vmatmul.mubr.f32.gmra.mrb[0].mxu0 %v557
    %v779 = vpop.f32.mrb[0].mxu0
    %v780 = vadd.f32 0.0, %v779
    %v781 = vpop.f32.mrb[0].mxu0
    %782 = vmatprep.mubr.f32.mxu0 0.0
    %783 = vmatmul.mubr.f32.gmra.mrb[0].mxu0 %v558
    %v784 = vpop.f32.mrb[0].mxu0
    %v785 = vadd.f32 0.0, %v784
    %v786 = vpop.f32.mrb[0].mxu0
    %787 = vmatprep.mubr.f32.mxu0 0.0
    %788 = vmatmul.mubr.f32.gmra.mrb[0].mxu0 %v559
    %v789 = vpop.f32.mrb[0].mxu0
    %v790 = vadd.f32 0.0, %v789
    %v791 = vpop.f32.mrb[0].mxu0
    %792 = vmatprep.mubr.f32.mxu0 0.0
    %793 = vmatmul.mubr.f32.gmra.mrb[0].mxu0 %v560
    %v794 = vpop.f32.mrb[0].mxu0
    %v795 = vadd.f32 0.0, %v794
    %v796 = vpop.f32.mrb[0].mxu0
    %797 = vmatprep.mubr.f32.mxu0 0.0
    %798 = vmatmul.mubr.f32.gmra.mrb[0].mxu0 %v561
    %v799 = vpop.f32.mrb[0].mxu0
    %v800 = vadd.f32 0.0, %v799
    %v801 = vpop.f32.mrb[0].mxu0
    %802 = vdwg.mxu0
    %803 = vst.msk [vmem:[#allocation2] sm:$0xff] %vm64, %v725
    %804 = vst.msk [vmem:[#allocation2 + $0x8] sm:$0xff] %vm64, %v730
    %805 = vst.msk [vmem:[#allocation2 + $0x10] sm:$0xff] %vm64, %v735
    %806 = vst.msk [vmem:[#allocation2 + $0x18] sm:$0xff] %vm64, %v740
    %807 = vst.msk [vmem:[#allocation2 + $0x20] sm:$0xff] %vm64, %v745
    %808 = vst.msk [vmem:[#allocation2 + $0x28] sm:$0xff] %vm64, %v750
    %809 = vst.msk [vmem:[#allocation2 + $0x30] sm:$0xff] %vm64, %v755
    %810 = vst.msk [vmem:[#allocation2 + $0x38] sm:$0xff] %vm64, %v760
    %811 = vst.msk [vmem:[#allocation2 + $0x40] sm:$0xff] %vm64, %v765
    %812 = vst.msk [vmem:[#allocation2 + $0x48] sm:$0xff] %vm64, %v770
    %813 = vst.msk [vmem:[#allocation2 + $0x50] sm:$0xff] %vm64, %v775
    %814 = vst.msk [vmem:[#allocation2 + $0x58] sm:$0xff] %vm64, %v780
    %815 = vst.msk [vmem:[#allocation2 + $0x60] sm:$0xff] %vm64, %v785
    %816 = vst.msk [vmem:[#allocation2 + $0x68] sm:$0xff] %vm64, %v790
    %817 = vst.msk [vmem:[#allocation2 + $0x70] sm:$0xff] %vm64, %v795
    %818 = vst.msk [vmem:[#allocation2 + $0x78] sm:$0xff] %vm64, %v800
    %s819 = smul.u32 0, 128
    %v820 = vlaneseq
    %v821 = vshrl.u32 %v820, 7
    %v822 = vadd.s32 %v821, 8
    %v823 = vadd.s32 %v821, 16
    %v824 = vadd.s32 %v821, 24
    %v825 = vadd.s32 %v821, 32
    %v826 = vadd.s32 %v821, 40
    %v827 = vadd.s32 %v821, 48
    %v828 = vadd.s32 %v821, 56
    %v829 = vadd.s32 %v821, 64
    %v830 = vadd.s32 %v821, 72
    %v831 = vadd.s32 %v821, 80
    %v832 = vadd.s32 %v821, 88
    %v833 = vadd.s32 %v821, 96
    %v834 = vadd.s32 %v821, 104
    %v835 = vadd.s32 %v821, 112
    %v836 = vadd.s32 %v821, 120
    %v837 = vstv %s819
    %v838 = vadd.s32 %v837, %v821
    %v839 = vadd.s32 %v837, %v822
    %v840 = vadd.s32 %v837, %v823
    %v841 = vadd.s32 %v837, %v824
    %v842 = vadd.s32 %v837, %v825
    %v843 = vadd.s32 %v837, %v826
    %v844 = vadd.s32 %v837, %v827
    %v845 = vadd.s32 %v837, %v828
    %v846 = vadd.s32 %v837, %v829
    %v847 = vadd.s32 %v837, %v830
    %v848 = vadd.s32 %v837, %v831
    %v849 = vadd.s32 %v837, %v832
    %v850 = vadd.s32 %v837, %v833
    %v851 = vadd.s32 %v837, %v834
    %v852 = vadd.s32 %v837, %v835
    %v853 = vadd.s32 %v837, %v836
    %vm854 = vcmp.lt.s32.totalorder %v838, 128
    %vm855 = vcmp.lt.s32.totalorder %v839, 128
    %vm856 = vcmp.lt.s32.totalorder %v840, 128
    %vm857 = vcmp.lt.s32.totalorder %v841, 128
    %vm858 = vcmp.lt.s32.totalorder %v842, 128
    %vm859 = vcmp.lt.s32.totalorder %v843, 128
    %vm860 = vcmp.lt.s32.totalorder %v844, 128
    %vm861 = vcmp.lt.s32.totalorder %v845, 128
    %vm862 = vcmp.lt.s32.totalorder %v846, 128
    %vm863 = vcmp.lt.s32.totalorder %v847, 128
    %vm864 = vcmp.lt.s32.totalorder %v848, 128
    %vm865 = vcmp.lt.s32.totalorder %v849, 128
    %vm866 = vcmp.lt.s32.totalorder %v850, 128
    %vm867 = vcmp.lt.s32.totalorder %v851, 128
    %vm868 = vcmp.lt.s32.totalorder %v852, 128
    %vm869 = vcmp.lt.s32.totalorder %v853, 128
    %v870 = vsel %vm854, 1, 0
    %v871 = vsel %vm855, 1, 0
    %v872 = vsel %vm856, 1, 0
    %v873 = vsel %vm857, 1, 0
    %v874 = vsel %vm858, 1, 0
    %v875 = vsel %vm859, 1, 0
    %v876 = vsel %vm860, 1, 0
    %v877 = vsel %vm861, 1, 0
    %v878 = vsel %vm862, 1, 0
    %v879 = vsel %vm863, 1, 0
    %v880 = vsel %vm864, 1, 0
    %v881 = vsel %vm865, 1, 0
    %v882 = vsel %vm866, 1, 0
    %v883 = vsel %vm867, 1, 0
    %v884 = vsel %vm868, 1, 0
    %v885 = vsel %vm869, 1, 0
    %v886 = vcvt.s32.f32 %v870
    %v887 = vcvt.s32.f32 %v871
    %v888 = vcvt.s32.f32 %v872
    %v889 = vcvt.s32.f32 %v873
    %v890 = vcvt.s32.f32 %v874
    %v891 = vcvt.s32.f32 %v875
    %v892 = vcvt.s32.f32 %v876
    %v893 = vcvt.s32.f32 %v877
    %v894 = vcvt.s32.f32 %v878
    %v895 = vcvt.s32.f32 %v879
    %v896 = vcvt.s32.f32 %v880
    %v897 = vcvt.s32.f32 %v881
    %v898 = vcvt.s32.f32 %v882
    %v899 = vcvt.s32.f32 %v883
    %v900 = vcvt.s32.f32 %v884
    %v901 = vcvt.s32.f32 %v885
    %v902 = vsub.f32 %v725, %v23
    %v903 = vsub.f32 %v730, %v24
    %v904 = vsub.f32 %v735, %v25
    %v905 = vsub.f32 %v740, %v26
    %v906 = vsub.f32 %v745, %v27
    %v907 = vsub.f32 %v750, %v28
    %v908 = vsub.f32 %v755, %v29
    %v909 = vsub.f32 %v760, %v30
    %v910 = vsub.f32 %v765, %v31
    %v911 = vsub.f32 %v770, %v32
    %v912 = vsub.f32 %v775, %v33
    %v913 = vsub.f32 %v780, %v34
    %v914 = vsub.f32 %v785, %v35
    %v915 = vsub.f32 %v790, %v36
    %v916 = vsub.f32 %v795, %v37
    %v917 = vsub.f32 %v800, %v38
    %v918 = vmul.f32 %v902, %v902
    %v919 = vmul.f32 %v903, %v903
    %v920 = vmul.f32 %v904, %v904
    %v921 = vmul.f32 %v905, %v905
    %v922 = vmul.f32 %v906, %v906
    %v923 = vmul.f32 %v907, %v907
    %v924 = vmul.f32 %v908, %v908
    %v925 = vmul.f32 %v909, %v909
    %v926 = vmul.f32 %v910, %v910
    %v927 = vmul.f32 %v911, %v911
    %v928 = vmul.f32 %v912, %v912
    %v929 = vmul.f32 %v913, %v913
    %v930 = vmul.f32 %v914, %v914
    %v931 = vmul.f32 %v915, %v915
    %v932 = vmul.f32 %v916, %v916
    %v933 = vmul.f32 %v917, %v917
    %v934 = vmul.f32 %v918, %v886
    %v935 = vmul.f32 %v919, %v887
    %v936 = vmul.f32 %v920, %v888
    %v937 = vmul.f32 %v921, %v889
    %v938 = vmul.f32 %v922, %v890
    %v939 = vmul.f32 %v923, %v891
    %v940 = vmul.f32 %v924, %v892
    %v941 = vmul.f32 %v925, %v893
    %v942 = vmul.f32 %v926, %v894
    %v943 = vmul.f32 %v927, %v895
    %v944 = vmul.f32 %v928, %v896
    %v945 = vmul.f32 %v929, %v897
    %v946 = vmul.f32 %v930, %v898
    %v947 = vmul.f32 %v931, %v899
    %v948 = vmul.f32 %v932, %v900
    %v949 = vmul.f32 %v933, %v901
    %v950 = vsel %vm64, %v934, 0.0
    %v951 = vsel %vm64, %v935, 0.0
    %v952 = vadd.f32 %v950, %v951
    %v953 = vsel %vm64, %v936, 0.0
    %v954 = vadd.f32 %v952, %v953
    %v955 = vsel %vm64, %v937, 0.0
    %v956 = vadd.f32 %v954, %v955
    %v957 = vsel %vm64, %v938, 0.0
    %v958 = vadd.f32 %v956, %v957
    %v959 = vsel %vm64, %v939, 0.0
    %v960 = vadd.f32 %v958, %v959
    %v961 = vsel %vm64, %v940, 0.0
    %v962 = vadd.f32 %v960, %v961
    %v963 = vsel %vm64, %v941, 0.0
    %v964 = vadd.f32 %v962, %v963
    %v965 = vsel %vm64, %v942, 0.0
    %v966 = vadd.f32 %v964, %v965
    %v967 = vsel %vm64, %v943, 0.0
    %v968 = vadd.f32 %v966, %v967
    %v969 = vsel %vm64, %v944, 0.0
    %v970 = vadd.f32 %v968, %v969
    %v971 = vsel %vm64, %v945, 0.0
    %v972 = vadd.f32 %v970, %v971
    %v973 = vsel %vm64, %v946, 0.0
    %v974 = vadd.f32 %v972, %v973
    %v975 = vsel %vm64, %v947, 0.0
    %v976 = vadd.f32 %v974, %v975
    %v977 = vsel %vm64, %v948, 0.0
    %v978 = vadd.f32 %v976, %v977
    %v979 = vsel %vm64, %v949, 0.0
    %v980 = vadd.f32 %v978, %v979
    %v981 = vrot.slane %v980, 4
    %v982 = vadd.f32 %v980, %v981
    %v983 = vrot.slane %v982, 2
    %v984 = vadd.f32 %v982, %v983
    %v985 = vrot.slane %v984, 1
    %v986 = vadd.f32 %v984, %v985
    %v987 = vsel %vm64, %v986, 0.0
    %988 = vadd.xlane.f32.xlu0 %v987
    %v989 = vpop.xlane.xlu0 %988
    %v990 = vmul.f32 %v546, %v886
    %v991 = vmul.f32 %v547, %v887
    %v992 = vmul.f32 %v548, %v888
    %v993 = vmul.f32 %v549, %v889
    %v994 = vmul.f32 %v550, %v890
    %v995 = vmul.f32 %v551, %v891
    %v996 = vmul.f32 %v552, %v892
    %v997 = vmul.f32 %v553, %v893
    %v998 = vmul.f32 %v554, %v894
    %v999 = vmul.f32 %v555, %v895
    %v1000 = vmul.f32 %v556, %v896
    %v1001 = vmul.f32 %v557, %v897
    %v1002 = vmul.f32 %v558, %v898
    %v1003 = vmul.f32 %v559, %v899
    %v1004 = vmul.f32 %v560, %v900
    %v1005 = vmul.f32 %v561, %v901
    %v1006 = vadd.f32 %v990, %v991
    %v1007 = vadd.f32 %v1006, %v992
    %v1008 = vadd.f32 %v1007, %v993
    %v1009 = vadd.f32 %v1008, %v994
    %v1010 = vadd.f32 %v1009, %v995
    %v1011 = vadd.f32 %v1010, %v996
    %v1012 = vadd.f32 %v1011, %v997
    %v1013 = vadd.f32 %v1012, %v998
    %v1014 = vadd.f32 %v1013, %v999
    %v1015 = vadd.f32 %v1014, %v1000
    %v1016 = vadd.f32 %v1015, %v1001
    %v1017 = vadd.f32 %v1016, %v1002
    %v1018 = vadd.f32 %v1017, %v1003
    %v1019 = vadd.f32 %v1018, %v1004
    %v1020 = vadd.f32 %v1019, %v1005
    %v1021 = vrot.slane %v1020, 4
    %v1022 = vadd.f32 %v1020, %v1021
    %v1023 = vrot.slane %v1022, 2
    %v1024 = vadd.f32 %v1022, %v1023
    %v1025 = vrot.slane %v1024, 1
    %v1026 = vadd.f32 %v1024, %v1025
    %vm1027 = vcmask 1040384
    %v1028 = vsel %vm1027, %v1026, %v989
    %1029 = vst [vmem:[%s6] sm:$0x3] %v1028
    // Predicated region
    $region18: #{vector_quantizer_forward.1} parent=1 // pred_check
      _
    $region19: #{vector_quantizer_forward.1} parent=1 // pred_check_branch
      %1031 = sbr.rel (0) target = $region21
    $region20: #{vector_quantizer_forward.1} parent=1 // pred_region
      %s1033 = ssub.s32 2048, 2048
      %1034 = vsyncadd [#allocation3], %s1033
      %s1035 = sshll.u32 [#allocation2], 4
      %s1036 = int_to_ptr.vmem [resolvable:$true] %s1035
      %1041 = dma.vmem_to_hbm [thread:$0]  %s1036, 2048, %s4, [#allocation3], 128, 128, 8
    $region21: #{vector_quantizer_forward.1} parent=1 // pred_fallthru
      _
    // Predicated region
    $region22: #{vector_quantizer_forward.1} parent=1 // pred_check
      _
    $region23: #{vector_quantizer_forward.1} parent=1 // pred_check_branch
      %1043 = sbr.rel (0) target = $region25
    $region24: #{vector_quantizer_forward.1} parent=1 // pred_region
      %s1045 = ssub.s32 1024, 1024
      %1046 = vsyncadd [#allocation5], %s1045
      %s1047 = sshll.u32 [#allocation4], 4
      %s1048 = int_to_ptr.vmem [resolvable:$true] %s1047
      %1053 = dma.vmem_to_hbm [thread:$0]  %s1048, 1024, %s5, [#allocation5], 64, 64, 4
    $region25: #{vector_quantizer_forward.1} parent=1 // pred_fallthru
      _
    // Predicated region
    $region26: #{vector_quantizer_forward.1} parent=1 // pred_check
      _
    $region27: #{vector_quantizer_forward.1} parent=1 // pred_check_branch
      %1055 = sbr.rel (0) target = $region29
    $region28: #{vector_quantizer_forward.1} parent=1 // pred_region
      _
    $region29: #{vector_quantizer_forward.1} parent=1 // pred_fallthru
      _
    // Predicated region
    $region30: #{vector_quantizer_forward.1} parent=1 // pred_check
      _
    $region31: #{vector_quantizer_forward.1} parent=1 // pred_check_branch
      %1057 = sbr.rel (0) target = $region33
    $region32: #{vector_quantizer_forward.1} parent=1 // pred_region
      %1058 = dma.done [#allocation3], 2048
    $region33: #{vector_quantizer_forward.1} parent=1 // pred_fallthru
      _
    // Predicated region
    $region34: #{vector_quantizer_forward.1} parent=1 // pred_check
      _
    $region35: #{vector_quantizer_forward.1} parent=1 // pred_check_branch
      %1060 = sbr.rel (0) target = $region37
    $region36: #{vector_quantizer_forward.1} parent=1 // pred_region
      %1061 = dma.done [#allocation5], 1024
    $region37: #{vector_quantizer_forward.1} parent=1 // pred_fallthru
      _
    // Predicated region
    $region38: #{vector_quantizer_forward.1} parent=1 // pred_check
      _
    $region39: #{vector_quantizer_forward.1} parent=1 // pred_check_branch
      %1063 = sbr.rel (0) target = $region41
    $region40: #{vector_quantizer_forward.1} parent=1 // pred_region
      _
    $region41: #{vector_quantizer_forward.1} parent=1 // pred_fallthru
      _
    %1064 = vsyncpa [#allocation3], 1
    %1065 = vsyncpa [#allocation5], 1

</llo_original>
